<compile_context>
chip_gen: v7x
topology: tpu7x:2x2x1
jax: 0.10.0
libtpu: 0.0.40
codegen_flags: <defaults>
</compile_context>

<pallas_src>
import functools

import jax
import jax.numpy as jnp
from jax.experimental import pallas as pl
from jax.experimental.pallas import tpu as pltpu


def _attention_kernel(x_ref, wqkv_ref, wpt_ref, bias_ref, o_ref,
                      qkv_ref, ctx_ref, *, num_heads, head_dim, compute_dtype):
    # x_ref:    (Bt, N, C)    current batch block (already compute_dtype)
    # wqkv_ref: (C, 3C)       fused [Q | K | V] weights, all heads, resident
    #                         (softmax scale folded into the Q columns)
    # wpt_ref:  (C, C)        W_proj^T, resident
    # bias_ref: (1, C)        proj bias, f32
    # o_ref:    (Bt, N, C)    output block
    # qkv_ref:  (Bt, N, 3C)   VMEM scratch (compute_dtype) for staged qkv
    # ctx_ref:  (Bt, N, C)    VMEM scratch (compute_dtype) for per-head contexts
    D = head_dim
    H = num_heads
    C = D * H

    # ---- fused QKV projection for the whole batch block (one wide matmul) --
    qkv = jax.lax.dot_general(
        x_ref[...], wqkv_ref[...],
        dimension_numbers=(((2,), (0,)), ((), ())),
        preferred_element_type=jnp.float32)                  # (Bt, N, 3C) f32
    qkv_ref[...] = qkv.astype(compute_dtype)

    # ---- per-head attention (short static loop, fully unrolled) ------------
    # TODO(synk): for D=64 heads on v6e/v7x, process head pairs so each q/k/v
    # slice is 128-lane aligned (avoids lane-shift copies before the matmuls).
    for h in range(H):
        q = qkv_ref[:, :, h * D:(h + 1) * D]                       # (Bt, N, D)
        k = qkv_ref[:, :, C + h * D:C + (h + 1) * D]               # (Bt, N, D)
        v = qkv_ref[:, :, 2 * C + h * D:2 * C + (h + 1) * D]       # (Bt, N, D)

        # Scores: scale already baked into the Q weights; contract head_dim of
        # both operands (no transpose materialized).
        s = jax.lax.dot_general(
            q, k, dimension_numbers=(((2,), (2,)), ((0,), (0,))),
            preferred_element_type=jnp.float32)                    # (Bt, N, N)

        s_max = jnp.max(s, axis=-1, keepdims=True)
        p = jnp.exp(s - s_max)                                     # EUP
        denom = jnp.sum(p, axis=-1, keepdims=True)                 # (Bt, N, 1)

        # Unnormalized context, then normalize the (N, D) result (cheaper than
        # scaling the (N, N) probabilities); reciprocal runs on the EUP slot.
        ctx = jax.lax.dot_general(
            p.astype(compute_dtype), v,
            dimension_numbers=(((2,), (1,)), ((0,), (0,))),
            preferred_element_type=jnp.float32)                    # (Bt, N, D)
        ctx = ctx * pl.reciprocal(denom, approx=False)

        ctx_ref[:, :, h * D:(h + 1) * D] = ctx.astype(compute_dtype)

    # ---- single C-deep output projection + bias -----------------------------
    out = jax.lax.dot_general(
        ctx_ref[...], wpt_ref[...],
        dimension_numbers=(((2,), (0,)), ((), ())),
        preferred_element_type=jnp.float32)                        # (Bt, N, C)
    o_ref[...] = (out + bias_ref[0]).astype(o_ref.dtype)


def _choose_batch_block(B, N, C, compute_itemsize, out_itemsize,
                        budget_bytes=24 * 1024 * 1024):
    """Largest batch block whose per-step VMEM footprint stays under budget."""
    def footprint(bt):
        io = 2 * bt * N * C * (compute_itemsize + out_itemsize)   # 2x-buffered x/out
        scratch = bt * N * 4 * C * compute_itemsize               # qkv + ctx scratch
        scores = 3 * bt * N * N * 4                               # f32 score/prob temps
        return io + scratch + scores

    best = 1
    for bt in range(1, B + 1):
        if B % bt:
            continue
        # Keep >= 2 grid steps where possible so v7x's second TensorCore has work.
        if (B // bt) < min(2, B):
            continue
        if footprint(bt) <= budget_bytes:
            best = bt
    return best


def attention_forward(x, wq, wk, wv, wp, bp, *, num_heads, qk_scale=None,
                      compute_dtype=jnp.bfloat16, batch_block=None):
    """x: (B, N, C). wq/wk/wv/wp: (C, C) PyTorch layout (out, in). bp: (C,).

    compute_dtype: MXU operand dtype (bf16 recommended on all generations,
    including v5e); accumulation and softmax statistics are always f32.
    """
    B, N, C = x.shape
    assert C % num_heads == 0, "dim should be divisible by num_heads"
    D = C // num_heads
    scale = qk_scale if qk_scale is not None else D ** (-0.5)

    compute_dtype = jnp.dtype(compute_dtype)
    out_dtype = x.dtype
    itm = compute_dtype.itemsize
    o_itm = jnp.dtype(out_dtype).itemsize

    # Fused [Q | K | V] weight in (in, out) layout; softmax scale folded into
    # the Q columns; cast once in the wrapper (no in-kernel casts / transposes).
    wqkv = jnp.concatenate([wq.T * scale, wk.T, wv.T], axis=1).astype(compute_dtype)  # (C, 3C)
    wpt = wp.T.astype(compute_dtype)                                                   # (C, C)
    bias = bp.reshape(1, C).astype(jnp.float32)
    x_in = x.astype(compute_dtype)

    if batch_block is None:
        batch_block = _choose_batch_block(B, N, C, itm, o_itm)
    Bt = batch_block
    assert B % Bt == 0, "batch_block must divide the batch size"

    kernel = functools.partial(_attention_kernel, num_heads=num_heads,
                               head_dim=D, compute_dtype=compute_dtype)

    grid_spec = pltpu.PrefetchScalarGridSpec(
        num_scalar_prefetch=0,
        grid=(B // Bt,),
        in_specs=[
            pl.BlockSpec((Bt, N, C), lambda b: (b, 0, 0)),   # x batch block
            pl.BlockSpec((C, 3 * C), lambda b: (0, 0)),      # fused QKV weight (resident)
            pl.BlockSpec((C, C), lambda b: (0, 0)),          # out-proj weight (resident)
            pl.BlockSpec((1, C), lambda b: (0, 0)),          # out-proj bias (resident)
        ],
        out_specs=pl.BlockSpec((Bt, N, C), lambda b: (b, 0, 0)),
        scratch_shapes=[
            pltpu.VMEM((Bt, N, 3 * C), compute_dtype),       # staged qkv
            pltpu.VMEM((Bt, N, C), compute_dtype),           # per-head contexts
        ],
    )

    # VMEM budget: double-buffered I/O blocks + resident weights + scratch +
    # f32 score temporaries, plus compiler headroom, capped for v7x's 64 MiB/TC.
    vmem_bytes = (2 * Bt * N * C * (itm + o_itm)
                  + 2 * 4 * C * C * itm + 2 * C * 4
                  + Bt * N * 4 * C * itm
                  + 3 * Bt * N * N * 4)
    vmem_limit = int(min(64 * 1024 * 1024,
                         max(vmem_bytes + 8 * 1024 * 1024, 16 * 1024 * 1024)))

    cost = pl.CostEstimate(
        flops=8 * B * N * C * C + 4 * B * N * N * C,
        transcendentals=B * num_heads * N * N,
        bytes_accessed=(x_in.size * itm + wqkv.size * itm + wpt.size * itm
                        + bias.size * 4 + B * N * C * o_itm),
    )

    return pl.pallas_call(
        kernel,
        out_shape=jax.ShapeDtypeStruct((B, N, C), out_dtype),
        grid_spec=grid_spec,
        compiler_params=pltpu.CompilerParams(
            dimension_semantics=("parallel",),
            vmem_limit_bytes=vmem_limit,
        ),
        cost_estimate=cost,
    )(x_in, wqkv, wpt, bias)
    # TODO(synk): for long sequences where the Bt*N*N f32 score temporaries
    # approach ~half of VMEM (hits v7x's 64 MiB roughly 2x sooner than
    # v5e/v6e's 128 MiB), add a kv-tile grid axis with online (flash) softmax.


def attention_reference(x, wq, wk, wv, wp, bp, *, num_heads, qk_scale=None):
    """Plain-JAX mirror of the PyTorch forward, for a correctness check."""
    B, N, C = x.shape
    D = C // num_heads
    scale = qk_scale if qk_scale is not None else D ** (-0.5)

    def proj(w):
        return (x @ w.T).reshape(B, N, num_heads, D).transpose(0, 2, 1, 3)

    q, k, v = proj(wq), proj(wk), proj(wv)
    attn = jnp.einsum('bhnd,bhmd->bhnm', q, k) * scale
    attn = jax.nn.softmax(attn, axis=-1)
    out = jnp.einsum('bhnm,bhmd->bhnd', attn, v)
    out = out.transpose(0, 2, 1, 3).reshape(B, N, C)
    return out @ wp.T + bp


if __name__ == "__main__":
    B, N, C = 2, 8, 32
    num_heads = 4

    key = jax.random.PRNGKey(0)
    kx, kq, kk, kv, kp, kb = jax.random.split(key, 6)

    x = jax.random.normal(kx, (B, N, C), dtype=jnp.float32)
    # Deterministic synthetic parameters (PyTorch Linear layout: (out, in)).
    wq = jax.random.normal(kq, (C, C), dtype=jnp.float32) * 0.05
    wk = jax.random.normal(kk, (C, C), dtype=jnp.float32) * 0.05
    wv = jax.random.normal(kv, (C, C), dtype=jnp.float32) * 0.05
    wp = jax.random.normal(kp, (C, C), dtype=jnp.float32) * 0.05
    bp = jax.random.normal(kb, (C,), dtype=jnp.float32) * 0.05

    ref = attention_reference(x, wq, wk, wv, wp, bp, num_heads=num_heads)

    # f32 MXU operands: tight tolerance.
    out_f32 = attention_forward(x, wq, wk, wv, wp, bp, num_heads=num_heads,
                                compute_dtype=jnp.float32)
    out_f32 = jax.block_until_ready(out_f32)
    assert out_f32.shape == (B, N, C)
    assert jnp.allclose(out_f32, ref, atol=1e-3, rtol=1e-3), "f32 mismatch vs reference"

    # bf16 MXU operands with f32 accumulation (default fast path): relaxed tolerance.
    out_bf16 = attention_forward(x, wq, wk, wv, wp, bp, num_heads=num_heads,
                                 compute_dtype=jnp.bfloat16)
    out_bf16 = jax.block_until_ready(out_bf16)
    assert out_bf16.shape == (B, N, C)
    assert jnp.allclose(out_bf16, ref, atol=3e-2, rtol=3e-2), "bf16 mismatch vs reference"

    print("KERNEL_OK")
</pallas_src>

<mosaic_0001>
module attributes {stable_mosaic.version = 11 : i64} {
  func.func @_attention_kernel(%arg0: i32, %arg1: memref<1x8x32xf32, #tpu.memory_space<vmem>>, %arg2: memref<32x96xf32, #tpu.memory_space<vmem>>, %arg3: memref<32x32xf32, #tpu.memory_space<vmem>>, %arg4: memref<1x32xf32, #tpu.memory_space<vmem>>, %arg5: memref<1x8x32xf32, #tpu.memory_space<vmem>>, %arg6: memref<1x8x96xf32, #tpu.memory_space<vmem>>, %arg7: memref<1x8x32xf32, #tpu.memory_space<vmem>>) attributes {dimension_semantics = [#tpu.dimension_semantics<parallel>], iteration_bounds = array<i64: 2>, scalar_prefetch = 0 : i64, scratch_operands = 2 : i64, tpu.core_type = #tpu.core_type<tc>, window_params = [{transform_indices = @transform_0, window_bounds = array<i64: 1, 8, 32>}, {pipeline_mode = #tpu.pipeline_mode<synchronous>, transform_indices = @transform_1, window_bounds = array<i64: 32, 96>}, {pipeline_mode = #tpu.pipeline_mode<synchronous>, transform_indices = @transform_2, window_bounds = array<i64: 32, 32>}, {pipeline_mode = #tpu.pipeline_mode<synchronous>, transform_indices = @transform_3, window_bounds = array<i64: 1, 32>}, {transform_indices = @transform_4, window_bounds = array<i64: 1, 8, 32>}]} {
    %c0 = arith.constant 0 : index
    %c0_0 = arith.constant 0 : index
    %c0_1 = arith.constant 0 : index
    %0 = vector.load %arg1[%c0, %c0_0, %c0_1] : memref<1x8x32xf32, #tpu.memory_space<vmem>>, vector<1x8x32xf32>
    %c0_2 = arith.constant 0 : index
    %c0_3 = arith.constant 0 : index
    %1 = vector.load %arg2[%c0_2, %c0_3] : memref<32x96xf32, #tpu.memory_space<vmem>>, vector<32x96xf32>
    %cst = arith.constant dense<0.000000e+00> : vector<1x8x96xf32>
    %2 = tpu.matmul %0, %1, %cst {dimension_numbers = #tpu.dot_dimension_numbers<[2], [0], [0, 1], [1], [0, 0, 0, 1, 1, 1], [], []>} : vector<1x8x32xf32>, vector<32x96xf32>, vector<1x8x96xf32> -> vector<1x8x96xf32>
    %c0_4 = arith.constant 0 : index
    %c0_5 = arith.constant 0 : index
    %c0_6 = arith.constant 0 : index
    %3 = vector.load %arg6[%c0_4, %c0_5, %c0_6] : memref<1x8x96xf32, #tpu.memory_space<vmem>>, vector<1x8x96xf32>
    tpu.vector_store %arg6[%c0_4, %c0_5, %c0_6], %2 {strides = array<i32>} : memref<1x8x96xf32, #tpu.memory_space<vmem>>, vector<1x8x96xf32>,
    %c0_7 = arith.constant 0 : index
    %c0_8 = arith.constant 0 : index
    %c0_9 = arith.constant 0 : index
    %4 = vector.load %arg6[%c0_7, %c0_8, %c0_9] : memref<1x8x96xf32, #tpu.memory_space<vmem>>, vector<1x8x8xf32>
    %c0_10 = arith.constant 0 : index
    %c0_11 = arith.constant 0 : index
    %c32 = arith.constant 32 : index
    %5 = vector.load %arg6[%c0_10, %c0_11, %c32] : memref<1x8x96xf32, #tpu.memory_space<vmem>>, vector<1x8x8xf32>
    %c0_12 = arith.constant 0 : index
    %c0_13 = arith.constant 0 : index
    %c64 = arith.constant 64 : index
    %6 = vector.load %arg6[%c0_12, %c0_13, %c64] : memref<1x8x96xf32, #tpu.memory_space<vmem>>, vector<1x8x8xf32>
    %cst_14 = arith.constant dense<0.000000e+00> : vector<1x8x8xf32>
    %7 = tpu.matmul %4, %5, %cst_14 {dimension_numbers = #tpu.dot_dimension_numbers<[2], [2], [1], [1], [0, 0, 0, 1, 1, 1], [0], [0]>} : vector<1x8x8xf32>, vector<1x8x8xf32>, vector<1x8x8xf32> -> vector<1x8x8xf32>
    %cst_15 = arith.constant dense<0xFF800000> : vector<1x8xf32>
    %8 = vector.multi_reduction <maximumf>, %7, %cst_15 [2] : vector<1x8x8xf32> to vector<1x8xf32>
    %9 = vector.shape_cast %8 : vector<1x8xf32> to vector<1x8x1xf32>
    %10 = vector.broadcast %9 : vector<1x8x1xf32> to vector<1x8x8xf32>
    %11 = arith.subf %7, %10 : vector<1x8x8xf32>
    %12 = math.exp %11 : vector<1x8x8xf32>
    %cst_16 = arith.constant dense<0.000000e+00> : vector<1x8xf32>
    %13 = vector.multi_reduction <add>, %12, %cst_16 [2] : vector<1x8x8xf32> to vector<1x8xf32>
    %14 = vector.shape_cast %13 : vector<1x8xf32> to vector<1x8x1xf32>
    %cst_17 = arith.constant dense<0.000000e+00> : vector<1x8x8xf32>
    %15 = tpu.matmul %12, %6, %cst_17 {dimension_numbers = #tpu.dot_dimension_numbers<[2], [1], [1], [2], [0, 0, 0, 1, 1, 2], [0], [0]>} : vector<1x8x8xf32>, vector<1x8x8xf32>, vector<1x8x8xf32> -> vector<1x8x8xf32>
    %16 = tpu.reciprocal %14 : vector<1x8x1xf32> -> vector<1x8x1xf32>
    %17 = vector.broadcast %16 : vector<1x8x1xf32> to vector<1x8x8xf32>
    %18 = arith.mulf %15, %17 : vector<1x8x8xf32>
    %c0_18 = arith.constant 0 : index
    %c0_19 = arith.constant 0 : index
    %c0_20 = arith.constant 0 : index
    %19 = vector.load %arg7[%c0_18, %c0_19, %c0_20] : memref<1x8x32xf32, #tpu.memory_space<vmem>>, vector<1x8x8xf32>
    tpu.vector_store %arg7[%c0_18, %c0_19, %c0_20], %18 {strides = array<i32>} : memref<1x8x32xf32, #tpu.memory_space<vmem>>, vector<1x8x8xf32>,
    %c0_21 = arith.constant 0 : index
    %c0_22 = arith.constant 0 : index
    %c8 = arith.constant 8 : index
    %20 = vector.load %arg6[%c0_21, %c0_22, %c8] : memref<1x8x96xf32, #tpu.memory_space<vmem>>, vector<1x8x8xf32>
    %c0_23 = arith.constant 0 : index
    %c0_24 = arith.constant 0 : index
    %c40 = arith.constant 40 : index
    %21 = vector.load %arg6[%c0_23, %c0_24, %c40] : memref<1x8x96xf32, #tpu.memory_space<vmem>>, vector<1x8x8xf32>
    %c0_25 = arith.constant 0 : index
    %c0_26 = arith.constant 0 : index
    %c72 = arith.constant 72 : index
    %22 = vector.load %arg6[%c0_25, %c0_26, %c72] : memref<1x8x96xf32, #tpu.memory_space<vmem>>, vector<1x8x8xf32>
    %cst_27 = arith.constant dense<0.000000e+00> : vector<1x8x8xf32>
    %23 = tpu.matmul %20, %21, %cst_27 {dimension_numbers = #tpu.dot_dimension_numbers<[2], [2], [1], [1], [0, 0, 0, 1, 1, 1], [0], [0]>} : vector<1x8x8xf32>, vector<1x8x8xf32>, vector<1x8x8xf32> -> vector<1x8x8xf32>
    %cst_28 = arith.constant dense<0xFF800000> : vector<1x8xf32>
    %24 = vector.multi_reduction <maximumf>, %23, %cst_28 [2] : vector<1x8x8xf32> to vector<1x8xf32>
    %25 = vector.shape_cast %24 : vector<1x8xf32> to vector<1x8x1xf32>
    %26 = vector.broadcast %25 : vector<1x8x1xf32> to vector<1x8x8xf32>
    %27 = arith.subf %23, %26 : vector<1x8x8xf32>
    %28 = math.exp %27 : vector<1x8x8xf32>
    %cst_29 = arith.constant dense<0.000000e+00> : vector<1x8xf32>
    %29 = vector.multi_reduction <add>, %28, %cst_29 [2] : vector<1x8x8xf32> to vector<1x8xf32>
    %30 = vector.shape_cast %29 : vector<1x8xf32> to vector<1x8x1xf32>
    %cst_30 = arith.constant dense<0.000000e+00> : vector<1x8x8xf32>
    %31 = tpu.matmul %28, %22, %cst_30 {dimension_numbers = #tpu.dot_dimension_numbers<[2], [1], [1], [2], [0, 0, 0, 1, 1, 2], [0], [0]>} : vector<1x8x8xf32>, vector<1x8x8xf32>, vector<1x8x8xf32> -> vector<1x8x8xf32>
    %32 = tpu.reciprocal %30 : vector<1x8x1xf32> -> vector<1x8x1xf32>
    %33 = vector.broadcast %32 : vector<1x8x1xf32> to vector<1x8x8xf32>
    %34 = arith.mulf %31, %33 : vector<1x8x8xf32>
    %c0_31 = arith.constant 0 : index
    %c0_32 = arith.constant 0 : index
    %c8_33 = arith.constant 8 : index
    %35 = vector.load %arg7[%c0_31, %c0_32, %c8_33] : memref<1x8x32xf32, #tpu.memory_space<vmem>>, vector<1x8x8xf32>
    tpu.vector_store %arg7[%c0_31, %c0_32, %c8_33], %34 {strides = array<i32>} : memref<1x8x32xf32, #tpu.memory_space<vmem>>, vector<1x8x8xf32>,
    %c0_34 = arith.constant 0 : index
    %c0_35 = arith.constant 0 : index
    %c16 = arith.constant 16 : index
    %36 = vector.load %arg6[%c0_34, %c0_35, %c16] : memref<1x8x96xf32, #tpu.memory_space<vmem>>, vector<1x8x8xf32>
    %c0_36 = arith.constant 0 : index
    %c0_37 = arith.constant 0 : index
    %c48 = arith.constant 48 : index
    %37 = vector.load %arg6[%c0_36, %c0_37, %c48] : memref<1x8x96xf32, #tpu.memory_space<vmem>>, vector<1x8x8xf32>
    %c0_38 = arith.constant 0 : index
    %c0_39 = arith.constant 0 : index
    %c80 = arith.constant 80 : index
    %38 = vector.load %arg6[%c0_38, %c0_39, %c80] : memref<1x8x96xf32, #tpu.memory_space<vmem>>, vector<1x8x8xf32>
    %cst_40 = arith.constant dense<0.000000e+00> : vector<1x8x8xf32>
    %39 = tpu.matmul %36, %37, %cst_40 {dimension_numbers = #tpu.dot_dimension_numbers<[2], [2], [1], [1], [0, 0, 0, 1, 1, 1], [0], [0]>} : vector<1x8x8xf32>, vector<1x8x8xf32>, vector<1x8x8xf32> -> vector<1x8x8xf32>
    %cst_41 = arith.constant dense<0xFF800000> : vector<1x8xf32>
    %40 = vector.multi_reduction <maximumf>, %39, %cst_41 [2] : vector<1x8x8xf32> to vector<1x8xf32>
    %41 = vector.shape_cast %40 : vector<1x8xf32> to vector<1x8x1xf32>
    %42 = vector.broadcast %41 : vector<1x8x1xf32> to vector<1x8x8xf32>
    %43 = arith.subf %39, %42 : vector<1x8x8xf32>
    %44 = math.exp %43 : vector<1x8x8xf32>
    %cst_42 = arith.constant dense<0.000000e+00> : vector<1x8xf32>
    %45 = vector.multi_reduction <add>, %44, %cst_42 [2] : vector<1x8x8xf32> to vector<1x8xf32>
    %46 = vector.shape_cast %45 : vector<1x8xf32> to vector<1x8x1xf32>
    %cst_43 = arith.constant dense<0.000000e+00> : vector<1x8x8xf32>
    %47 = tpu.matmul %44, %38, %cst_43 {dimension_numbers = #tpu.dot_dimension_numbers<[2], [1], [1], [2], [0, 0, 0, 1, 1, 2], [0], [0]>} : vector<1x8x8xf32>, vector<1x8x8xf32>, vector<1x8x8xf32> -> vector<1x8x8xf32>
    %48 = tpu.reciprocal %46 : vector<1x8x1xf32> -> vector<1x8x1xf32>
    %49 = vector.broadcast %48 : vector<1x8x1xf32> to vector<1x8x8xf32>
    %50 = arith.mulf %47, %49 : vector<1x8x8xf32>
    %c0_44 = arith.constant 0 : index
    %c0_45 = arith.constant 0 : index
    %c16_46 = arith.constant 16 : index
    %51 = vector.load %arg7[%c0_44, %c0_45, %c16_46] : memref<1x8x32xf32, #tpu.memory_space<vmem>>, vector<1x8x8xf32>
    tpu.vector_store %arg7[%c0_44, %c0_45, %c16_46], %50 {strides = array<i32>} : memref<1x8x32xf32, #tpu.memory_space<vmem>>, vector<1x8x8xf32>,
    %c0_47 = arith.constant 0 : index
    %c0_48 = arith.constant 0 : index
    %c24 = arith.constant 24 : index
    %52 = vector.load %arg6[%c0_47, %c0_48, %c24] : memref<1x8x96xf32, #tpu.memory_space<vmem>>, vector<1x8x8xf32>
    %c0_49 = arith.constant 0 : index
    %c0_50 = arith.constant 0 : index
    %c56 = arith.constant 56 : index
    %53 = vector.load %arg6[%c0_49, %c0_50, %c56] : memref<1x8x96xf32, #tpu.memory_space<vmem>>, vector<1x8x8xf32>
    %c0_51 = arith.constant 0 : index
    %c0_52 = arith.constant 0 : index
    %c88 = arith.constant 88 : index
    %54 = vector.load %arg6[%c0_51, %c0_52, %c88] : memref<1x8x96xf32, #tpu.memory_space<vmem>>, vector<1x8x8xf32>
    %cst_53 = arith.constant dense<0.000000e+00> : vector<1x8x8xf32>
    %55 = tpu.matmul %52, %53, %cst_53 {dimension_numbers = #tpu.dot_dimension_numbers<[2], [2], [1], [1], [0, 0, 0, 1, 1, 1], [0], [0]>} : vector<1x8x8xf32>, vector<1x8x8xf32>, vector<1x8x8xf32> -> vector<1x8x8xf32>
    %cst_54 = arith.constant dense<0xFF800000> : vector<1x8xf32>
    %56 = vector.multi_reduction <maximumf>, %55, %cst_54 [2] : vector<1x8x8xf32> to vector<1x8xf32>
    %57 = vector.shape_cast %56 : vector<1x8xf32> to vector<1x8x1xf32>
    %58 = vector.broadcast %57 : vector<1x8x1xf32> to vector<1x8x8xf32>
    %59 = arith.subf %55, %58 : vector<1x8x8xf32>
    %60 = math.exp %59 : vector<1x8x8xf32>
    %cst_55 = arith.constant dense<0.000000e+00> : vector<1x8xf32>
    %61 = vector.multi_reduction <add>, %60, %cst_55 [2] : vector<1x8x8xf32> to vector<1x8xf32>
    %62 = vector.shape_cast %61 : vector<1x8xf32> to vector<1x8x1xf32>
    %cst_56 = arith.constant dense<0.000000e+00> : vector<1x8x8xf32>
    %63 = tpu.matmul %60, %54, %cst_56 {dimension_numbers = #tpu.dot_dimension_numbers<[2], [1], [1], [2], [0, 0, 0, 1, 1, 2], [0], [0]>} : vector<1x8x8xf32>, vector<1x8x8xf32>, vector<1x8x8xf32> -> vector<1x8x8xf32>
    %64 = tpu.reciprocal %62 : vector<1x8x1xf32> -> vector<1x8x1xf32>
    %65 = vector.broadcast %64 : vector<1x8x1xf32> to vector<1x8x8xf32>
    %66 = arith.mulf %63, %65 : vector<1x8x8xf32>
    %c0_57 = arith.constant 0 : index
    %c0_58 = arith.constant 0 : index
    %c24_59 = arith.constant 24 : index
    %67 = vector.load %arg7[%c0_57, %c0_58, %c24_59] : memref<1x8x32xf32, #tpu.memory_space<vmem>>, vector<1x8x8xf32>
    tpu.vector_store %arg7[%c0_57, %c0_58, %c24_59], %66 {strides = array<i32>} : memref<1x8x32xf32, #tpu.memory_space<vmem>>, vector<1x8x8xf32>,
    %c0_60 = arith.constant 0 : index
    %c0_61 = arith.constant 0 : index
    %c0_62 = arith.constant 0 : index
    %68 = vector.load %arg7[%c0_60, %c0_61, %c0_62] : memref<1x8x32xf32, #tpu.memory_space<vmem>>, vector<1x8x32xf32>
    %c0_63 = arith.constant 0 : index
    %c0_64 = arith.constant 0 : index
    %69 = vector.load %arg3[%c0_63, %c0_64] : memref<32x32xf32, #tpu.memory_space<vmem>>, vector<32x32xf32>
    %cst_65 = arith.constant dense<0.000000e+00> : vector<1x8x32xf32>
    %70 = tpu.matmul %68, %69, %cst_65 {dimension_numbers = #tpu.dot_dimension_numbers<[2], [0], [0, 1], [1], [0, 0, 0, 1, 1, 1], [], []>} : vector<1x8x32xf32>, vector<32x32xf32>, vector<1x8x32xf32> -> vector<1x8x32xf32>
    %c0_66 = arith.constant 0 : index
    %c0_67 = arith.constant 0 : index
    %71 = vector.load %arg4[%c0_66, %c0_67] : memref<1x32xf32, #tpu.memory_space<vmem>>, vector<1x32xf32>
    %72 = vector.shape_cast %71 : vector<1x32xf32> to vector<32xf32>
    %73 = vector.shape_cast %72 : vector<32xf32> to vector<1x1x32xf32>
    %74 = vector.broadcast %73 : vector<1x1x32xf32> to vector<1x8x32xf32>
    %75 = arith.addf %70, %74 : vector<1x8x32xf32>
    %c0_68 = arith.constant 0 : index
    %c0_69 = arith.constant 0 : index
    %c0_70 = arith.constant 0 : index
    %76 = vector.load %arg5[%c0_68, %c0_69, %c0_70] : memref<1x8x32xf32, #tpu.memory_space<vmem>>, vector<1x8x32xf32>
    tpu.vector_store %arg5[%c0_68, %c0_69, %c0_70], %75 {strides = array<i32>} : memref<1x8x32xf32, #tpu.memory_space<vmem>>, vector<1x8x32xf32>,
    return
  }
  func.func @transform_0(%arg0: i32) -> (i32, i32, i32) {
    %c0_i32 = arith.constant 0 : i32
    %c0_i32_0 = arith.constant 0 : i32
    %c0_i32_1 = arith.constant 0 : i32
    return %arg0, %c0_i32, %c0_i32_0 : i32, i32, i32
  }
  func.func @transform_1(%arg0: i32) -> (i32, i32) {
    %c0_i32 = arith.constant 0 : i32
    %c0_i32_0 = arith.constant 0 : i32
    %c0_i32_1 = arith.constant 0 : i32
    return %c0_i32, %c0_i32_0 : i32, i32
  }
  func.func @transform_2(%arg0: i32) -> (i32, i32) {
    %c0_i32 = arith.constant 0 : i32
    %c0_i32_0 = arith.constant 0 : i32
    %c0_i32_1 = arith.constant 0 : i32
    return %c0_i32, %c0_i32_0 : i32, i32
  }
  func.func @transform_3(%arg0: i32) -> (i32, i32) {
    %c0_i32 = arith.constant 0 : i32
    %c0_i32_0 = arith.constant 0 : i32
    %c0_i32_1 = arith.constant 0 : i32
    return %c0_i32, %c0_i32_0 : i32, i32
  }
  func.func @transform_4(%arg0: i32) -> (i32, i32, i32) {
    %c0_i32 = arith.constant 0 : i32
    %c0_i32_0 = arith.constant 0 : i32
    %c0_i32_1 = arith.constant 0 : i32
    return %arg0, %c0_i32, %c0_i32_0 : i32, i32, i32
  }
}

</mosaic_0001>

<llo_original>
// kernel: tpu_custom_call.1
$region0: #{tpu_custom_call.1}
  #allocation0 [shape = 'u32[]', space=smem, size = 0x4, offset = 0x4, fixed_abs, tag = 'smem constant byte address 0x4 - core index']
  #allocation1 [shape = 'u32[144,128]{1,0:T(1,128)}', space=vmem, size = 0x12000, scoped, tag = 'internal scratch']
  #allocation2 [shape = 'f32[1,8,96]{2,1,0:T(8,128)}', space=vmem, size = 0x1000, scoped, tag = 'scratch operand']
  #allocation3 [shape = 'f32[1,8,32]{2,1,0:T(8,128)}', space=vmem, size = 0x1000, scoped, tag = 'scratch operand']
  %s0 = inlined_call_operand.hbm [shape: f32[2,8,32], index: 0, kind: input, shape index: {}]
  %s1 = inlined_call_operand.hbm [shape: f32[32,96], index: 1, kind: input, shape index: {}]
  %s2 = inlined_call_operand.hbm [shape: f32[32,32], index: 2, kind: input, shape index: {}]
  %s3 = inlined_call_operand.vmem [shape: f32[1,32], index: 3, kind: input, shape index: {}]
  %s4 = inlined_call_operand.hbm [shape: f32[2,8,32], index: 4, kind: output, shape index: {}]
  %s5 = sld [smem:[#allocation0]]
  $region61: #{tpu_custom_call.1} parent=0
    _
  %s7 = ssub.s32 1, %s5
  %s8 = scalar_select 0, %s7, %s5
  $region1: #{tpu_custom_call.1} parent=0
    #allocation4 [shape = 'u8[8192]{0}', space=vmem, size = 0x2000, scoped, tag = 'input window, operand 0']
    #allocation5 [shape = 's32[2]{0}', space=sflag, size = 0x8, scoped, tag = 'scoped memory for tpu_custom_call.1']
    #allocation6 [shape = 's32[2]{0}', space=sflag, size = 0x8, scoped, tag = 'scoped memory for tpu_custom_call.1']
    #allocation7 [shape = 'u8[16384]{0}', space=vmem, size = 0x4000, scoped, tag = 'input window, operand 1, single buffered']
    #allocation8 [shape = 's32[1]{0}', space=sflag, size = 0x4, scoped, tag = 'scoped memory for tpu_custom_call.1']
    #allocation9 [shape = 'u8[16384]{0}', space=vmem, size = 0x4000, scoped, tag = 'input window, operand 2, single buffered']
    #allocation10 [shape = 'u8[8192]{0}', space=vmem, size = 0x2000, scoped, tag = 'output window, operand 0']
    %9 = vsyncpa [#allocation5], 0
    %s10 = scalar_lea.sflag [#allocation5], 1
    %11 = vsyncpa %s10, 0
    %12 = vsyncpa [#allocation8], 0
    %13 = vsyncpa [#allocation6], 0
    %s14 = scalar_lea.sflag [#allocation6], 1
    %15 = vsyncpa %s14, 0
    loop: start=0, step=1, limit=4
    $region2: #{tpu_custom_call.1} parent=1 // loop_pre_header
      _
    $region3: #{tpu_custom_call.1} parent=1 // loop_header
      %s17 = sphi 0, %s21
      %p18 = scmp.ge.s32.totalorder %s17, 4
      %s27 = sphi 0, %s29
      %s30 = sphi 0, %s27
      %s31 = sphi 0, %s30
      %s47 = sphi 0, %s31
      %s51 = sphi 0, %s51
      %s53 = sphi 0, %s51
      %s54 = sphi 0, %s53
      %s68 = sphi 0, %s54
      %s72 = sphi 0, %s72
      %s74 = sphi 0, %s72
      %s75 = sphi 0, %s74
      %s89 = sphi 0, %s75
      %s93 = sphi 0, %s93
      %s95 = sphi 0, %s93
      %s96 = sphi 0, %s95
      %s110 = sphi 0, %s96
      %s116 = sphi 0, %s118
      %s119 = sphi 0, %s116
      %s120 = sphi 0, %s119
      %s136 = sphi 0, %s120
    $region4: #{tpu_custom_call.1} parent=1 // loop_header_branch
      %20 = sbr.rel (%p18) target = $region8
    $region5: #{tpu_custom_call.1} parent=1 // loop_body
      %s22 = ssub.s32 %s17, 1
      %s23 = ssub.s32 %s17, 2
      %s24 = sadd.s32 %s17, 1
      %s25 = ssub.s32 %s17, %s24
      %p26 = scmp.eq.s32.totalorder %s25, 0
      %s28 = sadd.s32 %s27, 1
      %s29 = scalar_select %p26, %s27, %s28
      %p32 = pneg %p26
      %p33 = scmp.eq.s32.totalorder %s17, 1
      %p34 = por %p32, %p33
      %p35 = scmp.ne.s32.totalorder %s27, %s30
      %p36 = scmp.eq.s32.totalorder %s17, 0
      %p37 = por %p35, %p36
      %p38 = scmp.ne.s32.totalorder %s27, %s30
      %p39 = scmp.eq.s32.totalorder %s22, 1
      %p40 = por %p38, %p39
      %p41 = scmp.ne.s32.totalorder %s30, %s31
      %p42 = scmp.eq.s32.totalorder %s22, 0
      %p43 = por %p41, %p42
      %p44 = scmp.ne.s32.totalorder %s30, %s31
      %p45 = scmp.eq.s32.totalorder %s23, 1
      %p46 = por %p44, %p45
      %p48 = scmp.ne.s32.totalorder %s31, %s47
      %p49 = scmp.eq.s32.totalorder %s23, 0
      %p50 = por %p48, %p49
      %s52 = sadd.s32 %s51, 1
      %p55 = scmp.eq.s32.totalorder %s17, 1
      %p56 = scmp.ne.s32.totalorder %s51, %s53
      %p57 = scmp.eq.s32.totalorder %s17, 0
      %p58 = por %p56, %p57
      %p59 = scmp.ne.s32.totalorder %s51, %s53
      %p60 = scmp.eq.s32.totalorder %s22, 1
      %p61 = por %p59, %p60
      %p62 = scmp.ne.s32.totalorder %s53, %s54
      %p63 = scmp.eq.s32.totalorder %s22, 0
      %p64 = por %p62, %p63
      %p65 = scmp.ne.s32.totalorder %s53, %s54
      %p66 = scmp.eq.s32.totalorder %s23, 1
      %p67 = por %p65, %p66
      %p69 = scmp.ne.s32.totalorder %s54, %s68
      %p70 = scmp.eq.s32.totalorder %s23, 0
      %p71 = por %p69, %p70
      %s73 = sadd.s32 %s72, 1
      %p76 = scmp.eq.s32.totalorder %s17, 1
      %p77 = scmp.ne.s32.totalorder %s72, %s74
      %p78 = scmp.eq.s32.totalorder %s17, 0
      %p79 = por %p77, %p78
      %p80 = scmp.ne.s32.totalorder %s72, %s74
      %p81 = scmp.eq.s32.totalorder %s22, 1
      %p82 = por %p80, %p81
      %p83 = scmp.ne.s32.totalorder %s74, %s75
      %p84 = scmp.eq.s32.totalorder %s22, 0
      %p85 = por %p83, %p84
      %p86 = scmp.ne.s32.totalorder %s74, %s75
      %p87 = scmp.eq.s32.totalorder %s23, 1
      %p88 = por %p86, %p87
      %p90 = scmp.ne.s32.totalorder %s75, %s89
      %p91 = scmp.eq.s32.totalorder %s23, 0
      %p92 = por %p90, %p91
      %s94 = sadd.s32 %s93, 1
      %p97 = scmp.eq.s32.totalorder %s17, 1
      %p98 = scmp.ne.s32.totalorder %s93, %s95
      %p99 = scmp.eq.s32.totalorder %s17, 0
      %p100 = por %p98, %p99
      %p101 = scmp.ne.s32.totalorder %s93, %s95
      %p102 = scmp.eq.s32.totalorder %s22, 1
      %p103 = por %p101, %p102
      %p104 = scmp.ne.s32.totalorder %s95, %s96
      %p105 = scmp.eq.s32.totalorder %s22, 0
      %p106 = por %p104, %p105
      %p107 = scmp.ne.s32.totalorder %s95, %s96
      %p108 = scmp.eq.s32.totalorder %s23, 1
      %p109 = por %p107, %p108
      %p111 = scmp.ne.s32.totalorder %s96, %s110
      %p112 = scmp.eq.s32.totalorder %s23, 0
      %p113 = por %p111, %p112
      %s114 = ssub.s32 %s17, %s24
      %p115 = scmp.eq.s32.totalorder %s114, 0
      %s117 = sadd.s32 %s116, 1
      %s118 = scalar_select %p115, %s116, %s117
      %p121 = pneg %p115
      %p122 = scmp.eq.s32.totalorder %s17, 1
      %p123 = por %p121, %p122
      %p124 = scmp.ne.s32.totalorder %s116, %s119
      %p125 = scmp.eq.s32.totalorder %s17, 0
      %p126 = por %p124, %p125
      %p127 = scmp.ne.s32.totalorder %s116, %s119
      %p128 = scmp.eq.s32.totalorder %s22, 1
      %p129 = por %p127, %p128
      %p130 = scmp.ne.s32.totalorder %s119, %s120
      %p131 = scmp.eq.s32.totalorder %s22, 0
      %p132 = por %p130, %p131
      %p133 = scmp.ne.s32.totalorder %s119, %s120
      %p134 = scmp.eq.s32.totalorder %s23, 1
      %p135 = por %p133, %p134
      %p137 = scmp.ne.s32.totalorder %s120, %s136
      %p138 = scmp.eq.s32.totalorder %s23, 0
      %p139 = por %p137, %p138
      %p140 = scmp.le.s32.totalorder 1, %s17
      %p141 = scmp.lt.s32.totalorder %s17, 3
      %p142 = pnand %p140, %p141
      %p143 = pneg %p142
      // Predicated region
      $region9: #{tpu_custom_call.1} parent=5 // pred_check
        _
      $region10: #{tpu_custom_call.1} parent=5 // pred_check_branch
        %145 = sbr.rel (%p142) target = $region12
      $region11: #{tpu_custom_call.1} parent=5 // pred_region
        %s146 = ssub.s32 %s17, 1
        // Predicated region
        $region13: #{tpu_custom_call.1} parent=11 // pred_check
          %p147 = pneg %p64
        $region14: #{tpu_custom_call.1} parent=11 // pred_check_branch
          %149 = sbr.rel (%p147) target = $region16
        $region15: #{tpu_custom_call.1} parent=11 // pred_region
          %s151 = ssub.s32 512, 512
          %152 = vsyncadd [#allocation8], %s151
          %s153 = sshll.u32 [#allocation7], 4
          %s154 = int_to_ptr.vmem [resolvable:$true] %s153
          %159 = dma.hbm_to_vmem [thread:$0]  %s1, 512, %s154, [#allocation8], 128, 128, 8
        $region16: #{tpu_custom_call.1} parent=11 // pred_fallthru
          _
        // Predicated region
        $region17: #{tpu_custom_call.1} parent=11 // pred_check
          %p160 = pneg %p85
        $region18: #{tpu_custom_call.1} parent=11 // pred_check_branch
          %162 = sbr.rel (%p160) target = $region20
        $region19: #{tpu_custom_call.1} parent=11 // pred_region
          %s164 = ssub.s32 512, 512
          %165 = vsyncadd [#allocation8], %s164
          %s166 = sshll.u32 [#allocation9], 4
          %s167 = int_to_ptr.vmem [resolvable:$true] %s166
          %172 = dma.hbm_to_vmem [thread:$0]  %s2, 512, %s167, [#allocation8], 128, 128, 8
        $region20: #{tpu_custom_call.1} parent=11 // pred_fallthru
          _
        // Predicated region
        $region21: #{tpu_custom_call.1} parent=11 // pred_check
          %p173 = pneg %p106
        $region22: #{tpu_custom_call.1} parent=11 // pred_check_branch
          %175 = sbr.rel (%p173) target = $region24
        $region23: #{tpu_custom_call.1} parent=11 // pred_region
          _
        $region24: #{tpu_custom_call.1} parent=11 // pred_fallthru
          _
      $region12: #{tpu_custom_call.1} parent=5 // pred_fallthru
        _
      %p176 = scmp.lt.s32.totalorder %s17, 2
      // Predicated region
      $region25: #{tpu_custom_call.1} parent=5 // pred_check
        %p177 = pneg %p176
      $region26: #{tpu_custom_call.1} parent=5 // pred_check_branch
        %179 = sbr.rel (%p177) target = $region28
      $region27: #{tpu_custom_call.1} parent=5 // pred_region
        // Predicated region
        $region29: #{tpu_custom_call.1} parent=27 // pred_check
          %p180 = pneg %p37
        $region30: #{tpu_custom_call.1} parent=27 // pred_check_branch
          %182 = sbr.rel (%p180) target = $region32
        $region31: #{tpu_custom_call.1} parent=27 // pred_region
          %s183 = sand.u32 %s27, 1
          %s184 = scalar_lea.sflag [#allocation5], %s183
          %s185 = sand.u32 %s27, 1
          %s186 = smul.addr %s185, 8
          %s187 = scalar_lea.vmem [#allocation4], %s186
          %s189 = ssub.s32 128, 128
          %190 = vsyncadd %s184, %s189
          %s191 = smul.addr %s17, 128
          %s192 = scalar_lea.hbm %s0, %s191
          %s194 = sshll.u32 %s187, 4
          %s195 = int_to_ptr.vmem [resolvable:$true] %s194
          %197 = dma.hbm_to_vmem [thread:$0]  %s192, 128, %s195, %s184
        $region32: #{tpu_custom_call.1} parent=27 // pred_fallthru
          _
      $region28: #{tpu_custom_call.1} parent=5 // pred_fallthru
        _
      %p198 = scmp.le.s32.totalorder 1, %s17
      %p199 = scmp.lt.s32.totalorder %s17, 3
      %p200 = pnand %p198, %p199
      %p201 = pneg %p200
      // Predicated region
      $region33: #{tpu_custom_call.1} parent=5 // pred_check
        _
      $region34: #{tpu_custom_call.1} parent=5 // pred_check_branch
        %203 = sbr.rel (%p200) target = $region36
      $region35: #{tpu_custom_call.1} parent=5 // pred_region
        %s204 = ssub.s32 %s17, 1
        %s205 = sand.u32 %s30, 1
        %s206 = scalar_lea.sflag [#allocation5], %s205
        %s207 = sand.u32 %s30, 1
        %s208 = smul.addr %s207, 8
        %s209 = scalar_lea.vmem [#allocation4], %s208
        // Predicated region
        $region37: #{tpu_custom_call.1} parent=35 // pred_check
          %p210 = pneg %p43
        $region38: #{tpu_custom_call.1} parent=35 // pred_check_branch
          %212 = sbr.rel (%p210) target = $region40
        $region39: #{tpu_custom_call.1} parent=35 // pred_region
          %213 = dma.done %s206, 128
        $region40: #{tpu_custom_call.1} parent=35 // pred_fallthru
          _
        // Predicated region
        $region41: #{tpu_custom_call.1} parent=35 // pred_check
          %p214 = pneg %p64
        $region42: #{tpu_custom_call.1} parent=35 // pred_check_branch
          %216 = sbr.rel (%p214) target = $region44
        $region43: #{tpu_custom_call.1} parent=35 // pred_region
          %217 = dma.done [#allocation8], 512
        $region44: #{tpu_custom_call.1} parent=35 // pred_fallthru
          _
        // Predicated region
        $region45: #{tpu_custom_call.1} parent=35 // pred_check
          %p218 = pneg %p85
        $region46: #{tpu_custom_call.1} parent=35 // pred_check_branch
          %220 = sbr.rel (%p218) target = $region48
        $region47: #{tpu_custom_call.1} parent=35 // pred_region
          %221 = dma.done [#allocation8], 512
        $region48: #{tpu_custom_call.1} parent=35 // pred_fallthru
          _
        %s222 = sand.u32 %s30, 1
        %s223 = scalar_lea.sflag [#allocation5], %s222
        %s224 = sand.u32 %s30, 1
        %s225 = smul.addr %s224, 8
        %s226 = scalar_lea.vmem [#allocation4], %s225
        %p227 = pneg %p43
        %p228 = pneg %p40
        %p229 = pneg %p64
        %p230 = pneg %p61
        %p231 = pneg %p85
        %p232 = pneg %p82
        %p233 = pneg %p106
        %p234 = pneg %p103
        %p235 = pneg %p132
        %p236 = pneg %p129
        %s237 = sand.u32 %s119, 1
        %s238 = scalar_lea.sflag [#allocation6], %s237
        %s239 = sand.u32 %s119, 1
        %s240 = smul.addr %s239, 8
        %s241 = scalar_lea.vmem [#allocation10], %s240
        %v242 = vld [vmem:[%s209] sm:$0xff]
        %v243 = vld [vmem:[#allocation7] sm:$0xff]
        %v244 = vld [vmem:[#allocation7 + $0x8] sm:$0xff]
        %v245 = vld [vmem:[#allocation7 + $0x10] sm:$0xff]
        %v246 = vld [vmem:[#allocation7 + $0x18] sm:$0xff]
        %vm247 = vcmask 261120
        %v249 = vsel %vm247, %v242, 0
        %251 = vmatprep.subr.mxu0 0.0
        %252 = vmatpush1.msra.mxu0 %v243
        %253 = vmatprep.subr.mxu0 0.0
        %254 = vmatpush1.msra.mxu0 %v244
        %255 = vmatprep.subr.mxu0 0.0
        %256 = vmatpush1.msra.mxu0 %v245
        %257 = vmatprep.subr.mxu0 0.0
        %258 = vmatpush1.msra.mxu0 %v246
        %259 = vmatprep.subr.mxu0 0.0
        %260 = vmatpush1.msra.mxu0 0.0
        %261 = vmatprep.subr.mxu0 0.0
        %262 = vmatpush1.msra.mxu0 0.0
        %263 = vmatprep.subr.mxu0 0.0
        %264 = vmatpush1.msra.mxu0 0.0
        %265 = vmatprep.subr.mxu0 0.0
        %266 = vmatpush1.msra.mxu0 0.0
        %267 = vmatprep.subr.mxu0 0.0
        %268 = vmatpush1.msra.mxu0 0.0
        %269 = vmatprep.subr.mxu0 0.0
        %270 = vmatpush1.msra.mxu0 0.0
        %271 = vmatprep.subr.mxu0 0.0
        %272 = vmatpush1.msra.mxu0 0.0
        %273 = vmatprep.subr.mxu0 0.0
        %274 = vmatpush1.msra.mxu0 0.0
        %275 = vmatprep.subr.mxu0 0.0
        %276 = vmatpush1.msra.mxu0 0.0
        %277 = vmatprep.subr.mxu0 0.0
        %278 = vmatpush1.msra.mxu0 0.0
        %279 = vmatprep.subr.mxu0 0.0
        %280 = vmatpush1.msra.mxu0 0.0
        %281 = vmatprep.subr.mxu0 0.0
        %282 = vmatpush1.msra.mxu0 0.0
        %283 = vmatprep.subr.mxu0 0.0
        %284 = vmatpush1.msra.mxu0 0.0
        %285 = vmatprep.subr.mxu0 0.0
        %286 = vmatpush1.msra.mxu0 0.0
        %287 = vmatprep.subr.mxu0 0.0
        %288 = vmatpush1.msra.mxu0 0.0
        %289 = vmatprep.subr.mxu0 0.0
        %290 = vmatpush1.msra.mxu0 0.0
        %291 = vmatprep.subr.mxu0 0.0
        %292 = vmatpush1.msra.mxu0 0.0
        %293 = vmatprep.subr.mxu0 0.0
        %294 = vmatpush1.msra.mxu0 0.0
        %295 = vmatprep.subr.mxu0 0.0
        %296 = vmatpush1.msra.mxu0 0.0
        %297 = vmatprep.subr.mxu0 0.0
        %298 = vmatpush1.msra.mxu0 0.0
        %299 = vmatprep.subr.mxu0 0.0
        %300 = vmatpush1.msra.mxu0 0.0
        %301 = vmatprep.subr.mxu0 0.0
        %302 = vmatpush1.msra.mxu0 0.0
        %303 = vmatprep.subr.mxu0 0.0
        %304 = vmatpush1.msra.mxu0 0.0
        %305 = vmatprep.subr.mxu0 0.0
        %306 = vmatpush1.msra.mxu0 0.0
        %307 = vmatprep.subr.mxu0 0.0
        %308 = vmatpush1.msra.mxu0 0.0
        %309 = vmatprep.subr.mxu0 0.0
        %310 = vmatpush1.msra.mxu0 0.0
        %311 = vmatprep.subr.mxu0 0.0
        %312 = vmatpush1.msra.mxu0 0.0
        %313 = vmatprep.subr.mxu0 0.0
        %314 = vmatpush1.msra.mxu0 0.0
        %315 = vmatprep.mubr.f32.mxu0 0.0
        %316 = vmatmul.mubr.f32.gmra.mrb[0].mxu0 %v249
        %v317 = vpop.f32.mrb[0].mxu0
        %v318 = vadd.f32 0.0, %v317
        %v319 = vpop.f32.mrb[0].mxu0
        %320 = vdwg.mxu0
        %vm321 = vcmask 785408
        %322 = vst.msk [vmem:[#allocation2] sm:$0xff] %vm321, %v318
        %v323 = vld [vmem:[#allocation2] sm:$0xff]
        %325 = vrot.lane.b32.xlu0 %v323, 96
        %v326 = vpop.permute.xlu0 %325
        %vm327 = vcmask 64512
        %v328 = vsel %vm327, %v323, 0
        %v330 = vsel %vm327, %v326, 0
        %332 = vmatprep.subr.mxu0 0.0
        %333 = vmatpush1.xpose.msra.mxu0 %v330
        %334 = vmatprep.subr.mxu0 0.0
        %335 = vmatpush1.xpose.msra.mxu0 0.0
        %336 = vmatprep.subr.mxu0 0.0
        %337 = vmatpush1.xpose.msra.mxu0 0.0
        %338 = vmatprep.subr.mxu0 0.0
        %339 = vmatpush1.xpose.msra.mxu0 0.0
        %340 = vmatprep.subr.mxu0 0.0
        %341 = vmatpush1.xpose.msra.mxu0 0.0
        %342 = vmatprep.subr.mxu0 0.0
        %343 = vmatpush1.xpose.msra.mxu0 0.0
        %344 = vmatprep.subr.mxu0 0.0
        %345 = vmatpush1.xpose.msra.mxu0 0.0
        %346 = vmatprep.subr.mxu0 0.0
        %347 = vmatpush1.xpose.msra.mxu0 0.0
        %348 = vmatprep.subr.mxu0 0.0
        %349 = vmatpush1.xpose.msra.mxu0 0.0
        %350 = vmatprep.subr.mxu0 0.0
        %351 = vmatpush1.xpose.msra.mxu0 0.0
        %352 = vmatprep.subr.mxu0 0.0
        %353 = vmatpush1.xpose.msra.mxu0 0.0
        %354 = vmatprep.subr.mxu0 0.0
        %355 = vmatpush1.xpose.msra.mxu0 0.0
        %356 = vmatprep.subr.mxu0 0.0
        %357 = vmatpush1.xpose.msra.mxu0 0.0
        %358 = vmatprep.subr.mxu0 0.0
        %359 = vmatpush1.xpose.msra.mxu0 0.0
        %360 = vmatprep.subr.mxu0 0.0
        %361 = vmatpush1.xpose.msra.mxu0 0.0
        %362 = vmatprep.subr.mxu0 0.0
        %363 = vmatpush1.xpose.msra.mxu0 0.0
        %364 = vmatprep.subr.mxu0 0.0
        %365 = vmatpush1.xpose.msra.mxu0 0.0
        %366 = vmatprep.subr.mxu0 0.0
        %367 = vmatpush1.xpose.msra.mxu0 0.0
        %368 = vmatprep.subr.mxu0 0.0
        %369 = vmatpush1.xpose.msra.mxu0 0.0
        %370 = vmatprep.subr.mxu0 0.0
        %371 = vmatpush1.xpose.msra.mxu0 0.0
        %372 = vmatprep.subr.mxu0 0.0
        %373 = vmatpush1.xpose.msra.mxu0 0.0
        %374 = vmatprep.subr.mxu0 0.0
        %375 = vmatpush1.xpose.msra.mxu0 0.0
        %376 = vmatprep.subr.mxu0 0.0
        %377 = vmatpush1.xpose.msra.mxu0 0.0
        %378 = vmatprep.subr.mxu0 0.0
        %379 = vmatpush1.xpose.msra.mxu0 0.0
        %380 = vmatprep.subr.mxu0 0.0
        %381 = vmatpush1.xpose.msra.mxu0 0.0
        %382 = vmatprep.subr.mxu0 0.0
        %383 = vmatpush1.xpose.msra.mxu0 0.0
        %384 = vmatprep.subr.mxu0 0.0
        %385 = vmatpush1.xpose.msra.mxu0 0.0
        %386 = vmatprep.subr.mxu0 0.0
        %387 = vmatpush1.xpose.msra.mxu0 0.0
        %388 = vmatprep.subr.mxu0 0.0
        %389 = vmatpush1.xpose.msra.mxu0 0.0
        %390 = vmatprep.subr.mxu0 0.0
        %391 = vmatpush1.xpose.msra.mxu0 0.0
        %392 = vmatprep.subr.mxu0 0.0
        %393 = vmatpush1.xpose.msra.mxu0 0.0
        %394 = vmatprep.subr.mxu0 0.0
        %395 = vmatpush1.xpose.msra.mxu0 0.0
        %396 = vmatprep.mubr.f32.mxu0 0.0
        %397 = vmatmul.mubr.f32.gmra.mrb[0].mxu0 %v328
        %v398 = vpop.f32.mrb[0].mxu0
        %v399 = vadd.f32 0.0, %v398
        %v400 = vpop.f32.mrb[0].mxu0
        %401 = vdwg.mxu0
        %v402 = vsel %vm327, %v399, -inf
        %403 = vmax.xlane.f32.xlu0 %v402
        %v404 = vpop.xlane.xlu0 %403
        %v405 = vsub.f32 %v399, %v404
        %v406 = vmul.f32 %v405, 1.442695
        %v407 = vpow.pop %v406
        %v408 = vsel %vm327, %v407, 0.0
        %409 = vadd.xlane.f32.xlu0 %v408
        %v410 = vpop.xlane.xlu0 %409
        %411 = vrot.lane.b32.xlu0 %v323, 64
        %v412 = vpop.permute.xlu0 %411
        %v415 = vsel %vm327, %v407, 0
        %417 = vmatprep.subr.mxu0 0.0
        %418 = vmatpush1.msra.mxu0 %v412
        %419 = vmatprep.subr.mxu0 0.0
        %420 = vmatpush1.msra.mxu0 0.0
        %421 = vmatprep.subr.mxu0 0.0
        %422 = vmatpush1.msra.mxu0 0.0
        %423 = vmatprep.subr.mxu0 0.0
        %424 = vmatpush1.msra.mxu0 0.0
        %425 = vmatprep.subr.mxu0 0.0
        %426 = vmatpush1.msra.mxu0 0.0
        %427 = vmatprep.subr.mxu0 0.0
        %428 = vmatpush1.msra.mxu0 0.0
        %429 = vmatprep.subr.mxu0 0.0
        %430 = vmatpush1.msra.mxu0 0.0
        %431 = vmatprep.subr.mxu0 0.0
        %432 = vmatpush1.msra.mxu0 0.0
        %433 = vmatprep.subr.mxu0 0.0
        %434 = vmatpush1.msra.mxu0 0.0
        %435 = vmatprep.subr.mxu0 0.0
        %436 = vmatpush1.msra.mxu0 0.0
        %437 = vmatprep.subr.mxu0 0.0
        %438 = vmatpush1.msra.mxu0 0.0
        %439 = vmatprep.subr.mxu0 0.0
        %440 = vmatpush1.msra.mxu0 0.0
        %441 = vmatprep.subr.mxu0 0.0
        %442 = vmatpush1.msra.mxu0 0.0
        %443 = vmatprep.subr.mxu0 0.0
        %444 = vmatpush1.msra.mxu0 0.0
        %445 = vmatprep.subr.mxu0 0.0
        %446 = vmatpush1.msra.mxu0 0.0
        %447 = vmatprep.subr.mxu0 0.0
        %448 = vmatpush1.msra.mxu0 0.0
        %449 = vmatprep.subr.mxu0 0.0
        %450 = vmatpush1.msra.mxu0 0.0
        %451 = vmatprep.subr.mxu0 0.0
        %452 = vmatpush1.msra.mxu0 0.0
        %453 = vmatprep.subr.mxu0 0.0
        %454 = vmatpush1.msra.mxu0 0.0
        %455 = vmatprep.subr.mxu0 0.0
        %456 = vmatpush1.msra.mxu0 0.0
        %457 = vmatprep.subr.mxu0 0.0
        %458 = vmatpush1.msra.mxu0 0.0
        %459 = vmatprep.subr.mxu0 0.0
        %460 = vmatpush1.msra.mxu0 0.0
        %461 = vmatprep.subr.mxu0 0.0
        %462 = vmatpush1.msra.mxu0 0.0
        %463 = vmatprep.subr.mxu0 0.0
        %464 = vmatpush1.msra.mxu0 0.0
        %465 = vmatprep.subr.mxu0 0.0
        %466 = vmatpush1.msra.mxu0 0.0
        %467 = vmatprep.subr.mxu0 0.0
        %468 = vmatpush1.msra.mxu0 0.0
        %469 = vmatprep.subr.mxu0 0.0
        %470 = vmatpush1.msra.mxu0 0.0
        %471 = vmatprep.subr.mxu0 0.0
        %472 = vmatpush1.msra.mxu0 0.0
        %473 = vmatprep.subr.mxu0 0.0
        %474 = vmatpush1.msra.mxu0 0.0
        %475 = vmatprep.subr.mxu0 0.0
        %476 = vmatpush1.msra.mxu0 0.0
        %477 = vmatprep.subr.mxu0 0.0
        %478 = vmatpush1.msra.mxu0 0.0
        %479 = vmatprep.subr.mxu0 0.0
        %480 = vmatpush1.msra.mxu0 0.0
        %481 = vmatprep.mubr.f32.mxu0 0.0
        %482 = vmatmul.mubr.f32.gmra.mrb[0].mxu0 %v415
        %v483 = vpop.f32.mrb[0].mxu0
        %v484 = vadd.f32 0.0, %v483
        %v485 = vpop.f32.mrb[0].mxu0
        %486 = vdwg.mxu0
        %v487 = vrcp.pop %v410
        %v488 = vmul.f32 %v484, %v487
        %489 = vst.msk [vmem:[#allocation3] sm:$0xff] %vm327, %v488
        %v490 = vld [vmem:[#allocation2] sm:$0xff]
        %492 = vrot.lane.b32.xlu0 %v490, 120
        %v493 = vpop.permute.xlu0 %492
        %494 = vrot.lane.b32.xlu0 %v490, 88
        %v495 = vpop.permute.xlu0 %494
        %v496 = vsel %vm327, %v493, 0
        %v498 = vsel %vm327, %v495, 0
        %500 = vmatprep.subr.mxu0 0.0
        %501 = vmatpush1.xpose.msra.mxu0 %v498
        %502 = vmatprep.subr.mxu0 0.0
        %503 = vmatpush1.xpose.msra.mxu0 0.0
        %504 = vmatprep.subr.mxu0 0.0
        %505 = vmatpush1.xpose.msra.mxu0 0.0
        %506 = vmatprep.subr.mxu0 0.0
        %507 = vmatpush1.xpose.msra.mxu0 0.0
        %508 = vmatprep.subr.mxu0 0.0
        %509 = vmatpush1.xpose.msra.mxu0 0.0
        %510 = vmatprep.subr.mxu0 0.0
        %511 = vmatpush1.xpose.msra.mxu0 0.0
        %512 = vmatprep.subr.mxu0 0.0
        %513 = vmatpush1.xpose.msra.mxu0 0.0
        %514 = vmatprep.subr.mxu0 0.0
        %515 = vmatpush1.xpose.msra.mxu0 0.0
        %516 = vmatprep.subr.mxu0 0.0
        %517 = vmatpush1.xpose.msra.mxu0 0.0
        %518 = vmatprep.subr.mxu0 0.0
        %519 = vmatpush1.xpose.msra.mxu0 0.0
        %520 = vmatprep.subr.mxu0 0.0
        %521 = vmatpush1.xpose.msra.mxu0 0.0
        %522 = vmatprep.subr.mxu0 0.0
        %523 = vmatpush1.xpose.msra.mxu0 0.0
        %524 = vmatprep.subr.mxu0 0.0
        %525 = vmatpush1.xpose.msra.mxu0 0.0
        %526 = vmatprep.subr.mxu0 0.0
        %527 = vmatpush1.xpose.msra.mxu0 0.0
        %528 = vmatprep.subr.mxu0 0.0
        %529 = vmatpush1.xpose.msra.mxu0 0.0
        %530 = vmatprep.subr.mxu0 0.0
        %531 = vmatpush1.xpose.msra.mxu0 0.0
        %532 = vmatprep.subr.mxu0 0.0
        %533 = vmatpush1.xpose.msra.mxu0 0.0
        %534 = vmatprep.subr.mxu0 0.0
        %535 = vmatpush1.xpose.msra.mxu0 0.0
        %536 = vmatprep.subr.mxu0 0.0
        %537 = vmatpush1.xpose.msra.mxu0 0.0
        %538 = vmatprep.subr.mxu0 0.0
        %539 = vmatpush1.xpose.msra.mxu0 0.0
        %540 = vmatprep.subr.mxu0 0.0
        %541 = vmatpush1.xpose.msra.mxu0 0.0
        %542 = vmatprep.subr.mxu0 0.0
        %543 = vmatpush1.xpose.msra.mxu0 0.0
        %544 = vmatprep.subr.mxu0 0.0
        %545 = vmatpush1.xpose.msra.mxu0 0.0
        %546 = vmatprep.subr.mxu0 0.0
        %547 = vmatpush1.xpose.msra.mxu0 0.0
        %548 = vmatprep.subr.mxu0 0.0
        %549 = vmatpush1.xpose.msra.mxu0 0.0
        %550 = vmatprep.subr.mxu0 0.0
        %551 = vmatpush1.xpose.msra.mxu0 0.0
        %552 = vmatprep.subr.mxu0 0.0
        %553 = vmatpush1.xpose.msra.mxu0 0.0
        %554 = vmatprep.subr.mxu0 0.0
        %555 = vmatpush1.xpose.msra.mxu0 0.0
        %556 = vmatprep.subr.mxu0 0.0
        %557 = vmatpush1.xpose.msra.mxu0 0.0
        %558 = vmatprep.subr.mxu0 0.0
        %559 = vmatpush1.xpose.msra.mxu0 0.0
        %560 = vmatprep.subr.mxu0 0.0
        %561 = vmatpush1.xpose.msra.mxu0 0.0
        %562 = vmatprep.subr.mxu0 0.0
        %563 = vmatpush1.xpose.msra.mxu0 0.0
        %564 = vmatprep.mubr.f32.mxu0 0.0
        %565 = vmatmul.mubr.f32.gmra.mrb[0].mxu0 %v496
        %v566 = vpop.f32.mrb[0].mxu0
        %v567 = vadd.f32 0.0, %v566
        %v568 = vpop.f32.mrb[0].mxu0
        %569 = vdwg.mxu0
        %v570 = vsel %vm327, %v567, -inf
        %571 = vmax.xlane.f32.xlu0 %v570
        %v572 = vpop.xlane.xlu0 %571
        %v573 = vsub.f32 %v567, %v572
        %v574 = vmul.f32 %v573, 1.442695
        %v575 = vpow.pop %v574
        %v576 = vsel %vm327, %v575, 0.0
        %577 = vadd.xlane.f32.xlu0 %v576
        %v578 = vpop.xlane.xlu0 %577
        %579 = vrot.lane.b32.xlu0 %v490, 56
        %v580 = vpop.permute.xlu0 %579
        %v583 = vsel %vm327, %v575, 0
        %585 = vmatprep.subr.mxu0 0.0
        %586 = vmatpush1.msra.mxu0 %v580
        %587 = vmatprep.subr.mxu0 0.0
        %588 = vmatpush1.msra.mxu0 0.0
        %589 = vmatprep.subr.mxu0 0.0
        %590 = vmatpush1.msra.mxu0 0.0
        %591 = vmatprep.subr.mxu0 0.0
        %592 = vmatpush1.msra.mxu0 0.0
        %593 = vmatprep.subr.mxu0 0.0
        %594 = vmatpush1.msra.mxu0 0.0
        %595 = vmatprep.subr.mxu0 0.0
        %596 = vmatpush1.msra.mxu0 0.0
        %597 = vmatprep.subr.mxu0 0.0
        %598 = vmatpush1.msra.mxu0 0.0
        %599 = vmatprep.subr.mxu0 0.0
        %600 = vmatpush1.msra.mxu0 0.0
        %601 = vmatprep.subr.mxu0 0.0
        %602 = vmatpush1.msra.mxu0 0.0
        %603 = vmatprep.subr.mxu0 0.0
        %604 = vmatpush1.msra.mxu0 0.0
        %605 = vmatprep.subr.mxu0 0.0
        %606 = vmatpush1.msra.mxu0 0.0
        %607 = vmatprep.subr.mxu0 0.0
        %608 = vmatpush1.msra.mxu0 0.0
        %609 = vmatprep.subr.mxu0 0.0
        %610 = vmatpush1.msra.mxu0 0.0
        %611 = vmatprep.subr.mxu0 0.0
        %612 = vmatpush1.msra.mxu0 0.0
        %613 = vmatprep.subr.mxu0 0.0
        %614 = vmatpush1.msra.mxu0 0.0
        %615 = vmatprep.subr.mxu0 0.0
        %616 = vmatpush1.msra.mxu0 0.0
        %617 = vmatprep.subr.mxu0 0.0
        %618 = vmatpush1.msra.mxu0 0.0
        %619 = vmatprep.subr.mxu0 0.0
        %620 = vmatpush1.msra.mxu0 0.0
        %621 = vmatprep.subr.mxu0 0.0
        %622 = vmatpush1.msra.mxu0 0.0
        %623 = vmatprep.subr.mxu0 0.0
        %624 = vmatpush1.msra.mxu0 0.0
        %625 = vmatprep.subr.mxu0 0.0
        %626 = vmatpush1.msra.mxu0 0.0
        %627 = vmatprep.subr.mxu0 0.0
        %628 = vmatpush1.msra.mxu0 0.0
        %629 = vmatprep.subr.mxu0 0.0
        %630 = vmatpush1.msra.mxu0 0.0
        %631 = vmatprep.subr.mxu0 0.0
        %632 = vmatpush1.msra.mxu0 0.0
        %633 = vmatprep.subr.mxu0 0.0
        %634 = vmatpush1.msra.mxu0 0.0
        %635 = vmatprep.subr.mxu0 0.0
        %636 = vmatpush1.msra.mxu0 0.0
        %637 = vmatprep.subr.mxu0 0.0
        %638 = vmatpush1.msra.mxu0 0.0
        %639 = vmatprep.subr.mxu0 0.0
        %640 = vmatpush1.msra.mxu0 0.0
        %641 = vmatprep.subr.mxu0 0.0
        %642 = vmatpush1.msra.mxu0 0.0
        %643 = vmatprep.subr.mxu0 0.0
        %644 = vmatpush1.msra.mxu0 0.0
        %645 = vmatprep.subr.mxu0 0.0
        %646 = vmatpush1.msra.mxu0 0.0
        %647 = vmatprep.subr.mxu0 0.0
        %648 = vmatpush1.msra.mxu0 0.0
        %649 = vmatprep.mubr.f32.mxu0 0.0
        %650 = vmatmul.mubr.f32.gmra.mrb[0].mxu0 %v583
        %v651 = vpop.f32.mrb[0].mxu0
        %v652 = vadd.f32 0.0, %v651
        %v653 = vpop.f32.mrb[0].mxu0
        %654 = vdwg.mxu0
        %v655 = vrcp.pop %v578
        %v656 = vmul.f32 %v652, %v655
        %658 = vrot.lane.b32.xlu0 %v656, 8
        %v659 = vpop.permute.xlu0 %658
        %vm661 = vcmask 130112
        %662 = vst.msk [vmem:[#allocation3] sm:$0xff] %vm661, %v659
        %v663 = vld [vmem:[#allocation2] sm:$0xff]
        %665 = vrot.lane.b32.xlu0 %v663, 112
        %v666 = vpop.permute.xlu0 %665
        %667 = vrot.lane.b32.xlu0 %v663, 80
        %v668 = vpop.permute.xlu0 %667
        %v669 = vsel %vm327, %v666, 0
        %v671 = vsel %vm327, %v668, 0
        %673 = vmatprep.subr.mxu0 0.0
        %674 = vmatpush1.xpose.msra.mxu0 %v671
        %675 = vmatprep.subr.mxu0 0.0
        %676 = vmatpush1.xpose.msra.mxu0 0.0
        %677 = vmatprep.subr.mxu0 0.0
        %678 = vmatpush1.xpose.msra.mxu0 0.0
        %679 = vmatprep.subr.mxu0 0.0
        %680 = vmatpush1.xpose.msra.mxu0 0.0
        %681 = vmatprep.subr.mxu0 0.0
        %682 = vmatpush1.xpose.msra.mxu0 0.0
        %683 = vmatprep.subr.mxu0 0.0
        %684 = vmatpush1.xpose.msra.mxu0 0.0
        %685 = vmatprep.subr.mxu0 0.0
        %686 = vmatpush1.xpose.msra.mxu0 0.0
        %687 = vmatprep.subr.mxu0 0.0
        %688 = vmatpush1.xpose.msra.mxu0 0.0
        %689 = vmatprep.subr.mxu0 0.0
        %690 = vmatpush1.xpose.msra.mxu0 0.0
        %691 = vmatprep.subr.mxu0 0.0
        %692 = vmatpush1.xpose.msra.mxu0 0.0
        %693 = vmatprep.subr.mxu0 0.0
        %694 = vmatpush1.xpose.msra.mxu0 0.0
        %695 = vmatprep.subr.mxu0 0.0
        %696 = vmatpush1.xpose.msra.mxu0 0.0
        %697 = vmatprep.subr.mxu0 0.0
        %698 = vmatpush1.xpose.msra.mxu0 0.0
        %699 = vmatprep.subr.mxu0 0.0
        %700 = vmatpush1.xpose.msra.mxu0 0.0
        %701 = vmatprep.subr.mxu0 0.0
        %702 = vmatpush1.xpose.msra.mxu0 0.0
        %703 = vmatprep.subr.mxu0 0.0
        %704 = vmatpush1.xpose.msra.mxu0 0.0
        %705 = vmatprep.subr.mxu0 0.0
        %706 = vmatpush1.xpose.msra.mxu0 0.0
        %707 = vmatprep.subr.mxu0 0.0
        %708 = vmatpush1.xpose.msra.mxu0 0.0
        %709 = vmatprep.subr.mxu0 0.0
        %710 = vmatpush1.xpose.msra.mxu0 0.0
        %711 = vmatprep.subr.mxu0 0.0
        %712 = vmatpush1.xpose.msra.mxu0 0.0
        %713 = vmatprep.subr.mxu0 0.0
        %714 = vmatpush1.xpose.msra.mxu0 0.0
        %715 = vmatprep.subr.mxu0 0.0
        %716 = vmatpush1.xpose.msra.mxu0 0.0
        %717 = vmatprep.subr.mxu0 0.0
        %718 = vmatpush1.xpose.msra.mxu0 0.0
        %719 = vmatprep.subr.mxu0 0.0
        %720 = vmatpush1.xpose.msra.mxu0 0.0
        %721 = vmatprep.subr.mxu0 0.0
        %722 = vmatpush1.xpose.msra.mxu0 0.0
        %723 = vmatprep.subr.mxu0 0.0
        %724 = vmatpush1.xpose.msra.mxu0 0.0
        %725 = vmatprep.subr.mxu0 0.0
        %726 = vmatpush1.xpose.msra.mxu0 0.0
        %727 = vmatprep.subr.mxu0 0.0
        %728 = vmatpush1.xpose.msra.mxu0 0.0
        %729 = vmatprep.subr.mxu0 0.0
        %730 = vmatpush1.xpose.msra.mxu0 0.0
        %731 = vmatprep.subr.mxu0 0.0
        %732 = vmatpush1.xpose.msra.mxu0 0.0
        %733 = vmatprep.subr.mxu0 0.0
        %734 = vmatpush1.xpose.msra.mxu0 0.0
        %735 = vmatprep.subr.mxu0 0.0
        %736 = vmatpush1.xpose.msra.mxu0 0.0
        %737 = vmatprep.mubr.f32.mxu0 0.0
        %738 = vmatmul.mubr.f32.gmra.mrb[0].mxu0 %v669
        %v739 = vpop.f32.mrb[0].mxu0
        %v740 = vadd.f32 0.0, %v739
        %v741 = vpop.f32.mrb[0].mxu0
        %742 = vdwg.mxu0
        %v743 = vsel %vm327, %v740, -inf
        %744 = vmax.xlane.f32.xlu0 %v743
        %v745 = vpop.xlane.xlu0 %744
        %v746 = vsub.f32 %v740, %v745
        %v747 = vmul.f32 %v746, 1.442695
        %v748 = vpow.pop %v747
        %v749 = vsel %vm327, %v748, 0.0
        %750 = vadd.xlane.f32.xlu0 %v749
        %v751 = vpop.xlane.xlu0 %750
        %752 = vrot.lane.b32.xlu0 %v663, 48
        %v753 = vpop.permute.xlu0 %752
        %v756 = vsel %vm327, %v748, 0
        %758 = vmatprep.subr.mxu0 0.0
        %759 = vmatpush1.msra.mxu0 %v753
        %760 = vmatprep.subr.mxu0 0.0
        %761 = vmatpush1.msra.mxu0 0.0
        %762 = vmatprep.subr.mxu0 0.0
        %763 = vmatpush1.msra.mxu0 0.0
        %764 = vmatprep.subr.mxu0 0.0
        %765 = vmatpush1.msra.mxu0 0.0
        %766 = vmatprep.subr.mxu0 0.0
        %767 = vmatpush1.msra.mxu0 0.0
        %768 = vmatprep.subr.mxu0 0.0
        %769 = vmatpush1.msra.mxu0 0.0
        %770 = vmatprep.subr.mxu0 0.0
        %771 = vmatpush1.msra.mxu0 0.0
        %772 = vmatprep.subr.mxu0 0.0
        %773 = vmatpush1.msra.mxu0 0.0
        %774 = vmatprep.subr.mxu0 0.0
        %775 = vmatpush1.msra.mxu0 0.0
        %776 = vmatprep.subr.mxu0 0.0
        %777 = vmatpush1.msra.mxu0 0.0
        %778 = vmatprep.subr.mxu0 0.0
        %779 = vmatpush1.msra.mxu0 0.0
        %780 = vmatprep.subr.mxu0 0.0
        %781 = vmatpush1.msra.mxu0 0.0
        %782 = vmatprep.subr.mxu0 0.0
        %783 = vmatpush1.msra.mxu0 0.0
        %784 = vmatprep.subr.mxu0 0.0
        %785 = vmatpush1.msra.mxu0 0.0
        %786 = vmatprep.subr.mxu0 0.0
        %787 = vmatpush1.msra.mxu0 0.0
        %788 = vmatprep.subr.mxu0 0.0
        %789 = vmatpush1.msra.mxu0 0.0
        %790 = vmatprep.subr.mxu0 0.0
        %791 = vmatpush1.msra.mxu0 0.0
        %792 = vmatprep.subr.mxu0 0.0
        %793 = vmatpush1.msra.mxu0 0.0
        %794 = vmatprep.subr.mxu0 0.0
        %795 = vmatpush1.msra.mxu0 0.0
        %796 = vmatprep.subr.mxu0 0.0
        %797 = vmatpush1.msra.mxu0 0.0
        %798 = vmatprep.subr.mxu0 0.0
        %799 = vmatpush1.msra.mxu0 0.0
        %800 = vmatprep.subr.mxu0 0.0
        %801 = vmatpush1.msra.mxu0 0.0
        %802 = vmatprep.subr.mxu0 0.0
        %803 = vmatpush1.msra.mxu0 0.0
        %804 = vmatprep.subr.mxu0 0.0
        %805 = vmatpush1.msra.mxu0 0.0
        %806 = vmatprep.subr.mxu0 0.0
        %807 = vmatpush1.msra.mxu0 0.0
        %808 = vmatprep.subr.mxu0 0.0
        %809 = vmatpush1.msra.mxu0 0.0
        %810 = vmatprep.subr.mxu0 0.0
        %811 = vmatpush1.msra.mxu0 0.0
        %812 = vmatprep.subr.mxu0 0.0
        %813 = vmatpush1.msra.mxu0 0.0
        %814 = vmatprep.subr.mxu0 0.0
        %815 = vmatpush1.msra.mxu0 0.0
        %816 = vmatprep.subr.mxu0 0.0
        %817 = vmatpush1.msra.mxu0 0.0
        %818 = vmatprep.subr.mxu0 0.0
        %819 = vmatpush1.msra.mxu0 0.0
        %820 = vmatprep.subr.mxu0 0.0
        %821 = vmatpush1.msra.mxu0 0.0
        %822 = vmatprep.mubr.f32.mxu0 0.0
        %823 = vmatmul.mubr.f32.gmra.mrb[0].mxu0 %v756
        %v824 = vpop.f32.mrb[0].mxu0
        %v825 = vadd.f32 0.0, %v824
        %v826 = vpop.f32.mrb[0].mxu0
        %827 = vdwg.mxu0
        %v828 = vrcp.pop %v751
        %v829 = vmul.f32 %v825, %v828
        %831 = vrot.lane.b32.xlu0 %v829, 16
        %v832 = vpop.permute.xlu0 %831
        %vm834 = vcmask 195712
        %835 = vst.msk [vmem:[#allocation3] sm:$0xff] %vm834, %v832
        %v836 = vld [vmem:[#allocation2] sm:$0xff]
        %838 = vrot.lane.b32.xlu0 %v836, 104
        %v839 = vpop.permute.xlu0 %838
        %840 = vrot.lane.b32.xlu0 %v836, 72
        %v841 = vpop.permute.xlu0 %840
        %v842 = vsel %vm327, %v839, 0
        %v844 = vsel %vm327, %v841, 0
        %846 = vmatprep.subr.mxu0 0.0
        %847 = vmatpush1.xpose.msra.mxu0 %v844
        %848 = vmatprep.subr.mxu0 0.0
        %849 = vmatpush1.xpose.msra.mxu0 0.0
        %850 = vmatprep.subr.mxu0 0.0
        %851 = vmatpush1.xpose.msra.mxu0 0.0
        %852 = vmatprep.subr.mxu0 0.0
        %853 = vmatpush1.xpose.msra.mxu0 0.0
        %854 = vmatprep.subr.mxu0 0.0
        %855 = vmatpush1.xpose.msra.mxu0 0.0
        %856 = vmatprep.subr.mxu0 0.0
        %857 = vmatpush1.xpose.msra.mxu0 0.0
        %858 = vmatprep.subr.mxu0 0.0
        %859 = vmatpush1.xpose.msra.mxu0 0.0
        %860 = vmatprep.subr.mxu0 0.0
        %861 = vmatpush1.xpose.msra.mxu0 0.0
        %862 = vmatprep.subr.mxu0 0.0
        %863 = vmatpush1.xpose.msra.mxu0 0.0
        %864 = vmatprep.subr.mxu0 0.0
        %865 = vmatpush1.xpose.msra.mxu0 0.0
        %866 = vmatprep.subr.mxu0 0.0
        %867 = vmatpush1.xpose.msra.mxu0 0.0
        %868 = vmatprep.subr.mxu0 0.0
        %869 = vmatpush1.xpose.msra.mxu0 0.0
        %870 = vmatprep.subr.mxu0 0.0
        %871 = vmatpush1.xpose.msra.mxu0 0.0
        %872 = vmatprep.subr.mxu0 0.0
        %873 = vmatpush1.xpose.msra.mxu0 0.0
        %874 = vmatprep.subr.mxu0 0.0
        %875 = vmatpush1.xpose.msra.mxu0 0.0
        %876 = vmatprep.subr.mxu0 0.0
        %877 = vmatpush1.xpose.msra.mxu0 0.0
        %878 = vmatprep.subr.mxu0 0.0
        %879 = vmatpush1.xpose.msra.mxu0 0.0
        %880 = vmatprep.subr.mxu0 0.0
        %881 = vmatpush1.xpose.msra.mxu0 0.0
        %882 = vmatprep.subr.mxu0 0.0
        %883 = vmatpush1.xpose.msra.mxu0 0.0
        %884 = vmatprep.subr.mxu0 0.0
        %885 = vmatpush1.xpose.msra.mxu0 0.0
        %886 = vmatprep.subr.mxu0 0.0
        %887 = vmatpush1.xpose.msra.mxu0 0.0
        %888 = vmatprep.subr.mxu0 0.0
        %889 = vmatpush1.xpose.msra.mxu0 0.0
        %890 = vmatprep.subr.mxu0 0.0
        %891 = vmatpush1.xpose.msra.mxu0 0.0
        %892 = vmatprep.subr.mxu0 0.0
        %893 = vmatpush1.xpose.msra.mxu0 0.0
        %894 = vmatprep.subr.mxu0 0.0
        %895 = vmatpush1.xpose.msra.mxu0 0.0
        %896 = vmatprep.subr.mxu0 0.0
        %897 = vmatpush1.xpose.msra.mxu0 0.0
        %898 = vmatprep.subr.mxu0 0.0
        %899 = vmatpush1.xpose.msra.mxu0 0.0
        %900 = vmatprep.subr.mxu0 0.0
        %901 = vmatpush1.xpose.msra.mxu0 0.0
        %902 = vmatprep.subr.mxu0 0.0
        %903 = vmatpush1.xpose.msra.mxu0 0.0
        %904 = vmatprep.subr.mxu0 0.0
        %905 = vmatpush1.xpose.msra.mxu0 0.0
        %906 = vmatprep.subr.mxu0 0.0
        %907 = vmatpush1.xpose.msra.mxu0 0.0
        %908 = vmatprep.subr.mxu0 0.0
        %909 = vmatpush1.xpose.msra.mxu0 0.0
        %910 = vmatprep.mubr.f32.mxu0 0.0
        %911 = vmatmul.mubr.f32.gmra.mrb[0].mxu0 %v842
        %v912 = vpop.f32.mrb[0].mxu0
        %v913 = vadd.f32 0.0, %v912
        %v914 = vpop.f32.mrb[0].mxu0
        %915 = vdwg.mxu0
        %v916 = vsel %vm327, %v913, -inf
        %917 = vmax.xlane.f32.xlu0 %v916
        %v918 = vpop.xlane.xlu0 %917
        %v919 = vsub.f32 %v913, %v918
        %v920 = vmul.f32 %v919, 1.442695
        %v921 = vpow.pop %v920
        %v922 = vsel %vm327, %v921, 0.0
        %923 = vadd.xlane.f32.xlu0 %v922
        %v924 = vpop.xlane.xlu0 %923
        %925 = vrot.lane.b32.xlu0 %v836, 40
        %v926 = vpop.permute.xlu0 %925
        %v929 = vsel %vm327, %v921, 0
        %931 = vmatprep.subr.mxu0 0.0
        %932 = vmatpush1.msra.mxu0 %v926
        %933 = vmatprep.subr.mxu0 0.0
        %934 = vmatpush1.msra.mxu0 0.0
        %935 = vmatprep.subr.mxu0 0.0
        %936 = vmatpush1.msra.mxu0 0.0
        %937 = vmatprep.subr.mxu0 0.0
        %938 = vmatpush1.msra.mxu0 0.0
        %939 = vmatprep.subr.mxu0 0.0
        %940 = vmatpush1.msra.mxu0 0.0
        %941 = vmatprep.subr.mxu0 0.0
        %942 = vmatpush1.msra.mxu0 0.0
        %943 = vmatprep.subr.mxu0 0.0
        %944 = vmatpush1.msra.mxu0 0.0
        %945 = vmatprep.subr.mxu0 0.0
        %946 = vmatpush1.msra.mxu0 0.0
        %947 = vmatprep.subr.mxu0 0.0
        %948 = vmatpush1.msra.mxu0 0.0
        %949 = vmatprep.subr.mxu0 0.0
        %950 = vmatpush1.msra.mxu0 0.0
        %951 = vmatprep.subr.mxu0 0.0
        %952 = vmatpush1.msra.mxu0 0.0
        %953 = vmatprep.subr.mxu0 0.0
        %954 = vmatpush1.msra.mxu0 0.0
        %955 = vmatprep.subr.mxu0 0.0
        %956 = vmatpush1.msra.mxu0 0.0
        %957 = vmatprep.subr.mxu0 0.0
        %958 = vmatpush1.msra.mxu0 0.0
        %959 = vmatprep.subr.mxu0 0.0
        %960 = vmatpush1.msra.mxu0 0.0
        %961 = vmatprep.subr.mxu0 0.0
        %962 = vmatpush1.msra.mxu0 0.0
        %963 = vmatprep.subr.mxu0 0.0
        %964 = vmatpush1.msra.mxu0 0.0
        %965 = vmatprep.subr.mxu0 0.0
        %966 = vmatpush1.msra.mxu0 0.0
        %967 = vmatprep.subr.mxu0 0.0
        %968 = vmatpush1.msra.mxu0 0.0
        %969 = vmatprep.subr.mxu0 0.0
        %970 = vmatpush1.msra.mxu0 0.0
        %971 = vmatprep.subr.mxu0 0.0
        %972 = vmatpush1.msra.mxu0 0.0
        %973 = vmatprep.subr.mxu0 0.0
        %974 = vmatpush1.msra.mxu0 0.0
        %975 = vmatprep.subr.mxu0 0.0
        %976 = vmatpush1.msra.mxu0 0.0
        %977 = vmatprep.subr.mxu0 0.0
        %978 = vmatpush1.msra.mxu0 0.0
        %979 = vmatprep.subr.mxu0 0.0
        %980 = vmatpush1.msra.mxu0 0.0
        %981 = vmatprep.subr.mxu0 0.0
        %982 = vmatpush1.msra.mxu0 0.0
        %983 = vmatprep.subr.mxu0 0.0
        %984 = vmatpush1.msra.mxu0 0.0
        %985 = vmatprep.subr.mxu0 0.0
        %986 = vmatpush1.msra.mxu0 0.0
        %987 = vmatprep.subr.mxu0 0.0
        %988 = vmatpush1.msra.mxu0 0.0
        %989 = vmatprep.subr.mxu0 0.0
        %990 = vmatpush1.msra.mxu0 0.0
        %991 = vmatprep.subr.mxu0 0.0
        %992 = vmatpush1.msra.mxu0 0.0
        %993 = vmatprep.subr.mxu0 0.0
        %994 = vmatpush1.msra.mxu0 0.0
        %995 = vmatprep.mubr.f32.mxu0 0.0
        %996 = vmatmul.mubr.f32.gmra.mrb[0].mxu0 %v929
        %v997 = vpop.f32.mrb[0].mxu0
        %v998 = vadd.f32 0.0, %v997
        %v999 = vpop.f32.mrb[0].mxu0
        %1000 = vdwg.mxu0
        %v1001 = vrcp.pop %v924
        %v1002 = vmul.f32 %v998, %v1001
        %1004 = vrot.lane.b32.xlu0 %v1002, 24
        %v1005 = vpop.permute.xlu0 %1004
        %vm1007 = vcmask 261312
        %1008 = vst.msk [vmem:[#allocation3] sm:$0xff] %vm1007, %v1005
        %v1009 = vld [vmem:[#allocation3] sm:$0xff]
        %v1010 = vld [vmem:[#allocation9] sm:$0xff]
        %v1011 = vld [vmem:[#allocation9 + $0x8] sm:$0xff]
        %v1012 = vld [vmem:[#allocation9 + $0x10] sm:$0xff]
        %v1013 = vld [vmem:[#allocation9 + $0x18] sm:$0xff]
        %v1014 = vld [vmem:[%s3] sm:$0x1]
        %v1016 = vlaneseq
        %v1017 = vshrl.u32 %v1016, 7
        %v1018 = vsub.s32 0, %v1017
        %v1019 = vrot.slane %v1014, %v1018
        %v1022 = vsel %vm247, %v1009, 0
        %1024 = vmatprep.subr.mxu0 0.0
        %1025 = vmatpush1.msra.mxu0 %v1010
        %1026 = vmatprep.subr.mxu0 0.0
        %1027 = vmatpush1.msra.mxu0 %v1011
        %1028 = vmatprep.subr.mxu0 0.0
        %1029 = vmatpush1.msra.mxu0 %v1012
        %1030 = vmatprep.subr.mxu0 0.0
        %1031 = vmatpush1.msra.mxu0 %v1013
        %1032 = vmatprep.subr.mxu0 0.0
        %1033 = vmatpush1.msra.mxu0 0.0
        %1034 = vmatprep.subr.mxu0 0.0
        %1035 = vmatpush1.msra.mxu0 0.0
        %1036 = vmatprep.subr.mxu0 0.0
        %1037 = vmatpush1.msra.mxu0 0.0
        %1038 = vmatprep.subr.mxu0 0.0
        %1039 = vmatpush1.msra.mxu0 0.0
        %1040 = vmatprep.subr.mxu0 0.0
        %1041 = vmatpush1.msra.mxu0 0.0
        %1042 = vmatprep.subr.mxu0 0.0
        %1043 = vmatpush1.msra.mxu0 0.0
        %1044 = vmatprep.subr.mxu0 0.0
        %1045 = vmatpush1.msra.mxu0 0.0
        %1046 = vmatprep.subr.mxu0 0.0
        %1047 = vmatpush1.msra.mxu0 0.0
        %1048 = vmatprep.subr.mxu0 0.0
        %1049 = vmatpush1.msra.mxu0 0.0
        %1050 = vmatprep.subr.mxu0 0.0
        %1051 = vmatpush1.msra.mxu0 0.0
        %1052 = vmatprep.subr.mxu0 0.0
        %1053 = vmatpush1.msra.mxu0 0.0
        %1054 = vmatprep.subr.mxu0 0.0
        %1055 = vmatpush1.msra.mxu0 0.0
        %1056 = vmatprep.subr.mxu0 0.0
        %1057 = vmatpush1.msra.mxu0 0.0
        %1058 = vmatprep.subr.mxu0 0.0
        %1059 = vmatpush1.msra.mxu0 0.0
        %1060 = vmatprep.subr.mxu0 0.0
        %1061 = vmatpush1.msra.mxu0 0.0
        %1062 = vmatprep.subr.mxu0 0.0
        %1063 = vmatpush1.msra.mxu0 0.0
        %1064 = vmatprep.subr.mxu0 0.0
        %1065 = vmatpush1.msra.mxu0 0.0
        %1066 = vmatprep.subr.mxu0 0.0
        %1067 = vmatpush1.msra.mxu0 0.0
        %1068 = vmatprep.subr.mxu0 0.0
        %1069 = vmatpush1.msra.mxu0 0.0
        %1070 = vmatprep.subr.mxu0 0.0
        %1071 = vmatpush1.msra.mxu0 0.0
        %1072 = vmatprep.subr.mxu0 0.0
        %1073 = vmatpush1.msra.mxu0 0.0
        %1074 = vmatprep.subr.mxu0 0.0
        %1075 = vmatpush1.msra.mxu0 0.0
        %1076 = vmatprep.subr.mxu0 0.0
        %1077 = vmatpush1.msra.mxu0 0.0
        %1078 = vmatprep.subr.mxu0 0.0
        %1079 = vmatpush1.msra.mxu0 0.0
        %1080 = vmatprep.subr.mxu0 0.0
        %1081 = vmatpush1.msra.mxu0 0.0
        %1082 = vmatprep.subr.mxu0 0.0
        %1083 = vmatpush1.msra.mxu0 0.0
        %1084 = vmatprep.subr.mxu0 0.0
        %1085 = vmatpush1.msra.mxu0 0.0
        %1086 = vmatprep.subr.mxu0 0.0
        %1087 = vmatpush1.msra.mxu0 0.0
        %1088 = vmatprep.mubr.f32.mxu0 0.0
        %1089 = vmatmul.mubr.f32.gmra.mrb[0].mxu0 %v1022
        %v1090 = vpop.f32.mrb[0].mxu0
        %v1091 = vadd.f32 %v1019, %v1090
        %v1092 = vpop.f32.mrb[0].mxu0
        %1093 = vdwg.mxu0
        %1094 = vst.msk [vmem:[%s241] sm:$0xff] %vm247, %v1091
        %s1095 = sand.u32 %s119, 1
        %s1096 = scalar_lea.sflag [#allocation6], %s1095
        %s1097 = sand.u32 %s119, 1
        %s1098 = smul.addr %s1097, 8
        %s1099 = scalar_lea.vmem [#allocation10], %s1098
        // Predicated region
        $region49: #{tpu_custom_call.1} parent=35 // pred_check
          %p1100 = pneg %p129
        $region50: #{tpu_custom_call.1} parent=35 // pred_check_branch
          %1102 = sbr.rel (%p1100) target = $region52
        $region51: #{tpu_custom_call.1} parent=35 // pred_region
          %s1104 = ssub.s32 128, 128
          %1105 = vsyncadd %s1096, %s1104
          %s1106 = smul.addr %s22, 128
          %s1107 = scalar_lea.hbm %s4, %s1106
          %s1109 = sshll.u32 %s1099, 4
          %s1110 = int_to_ptr.vmem [resolvable:$true] %s1109
          %1112 = dma.vmem_to_hbm [thread:$0]  %s1110, 128, %s1107, %s1096
        $region52: #{tpu_custom_call.1} parent=35 // pred_fallthru
          _
      $region36: #{tpu_custom_call.1} parent=5 // pred_fallthru
        _
      %p1113 = scmp.le.s32.totalorder 2, %s17
      // Predicated region
      $region53: #{tpu_custom_call.1} parent=5 // pred_check
        %p1114 = pneg %p1113
      $region54: #{tpu_custom_call.1} parent=5 // pred_check_branch
        %1116 = sbr.rel (%p1114) target = $region56
      $region55: #{tpu_custom_call.1} parent=5 // pred_region
        %s1117 = ssub.s32 %s17, 2
        // Predicated region
        $region57: #{tpu_custom_call.1} parent=55 // pred_check
          %p1118 = pneg %p135
        $region58: #{tpu_custom_call.1} parent=55 // pred_check_branch
          %1120 = sbr.rel (%p1118) target = $region60
        $region59: #{tpu_custom_call.1} parent=55 // pred_region
          %s1121 = sand.u32 %s120, 1
          %s1122 = scalar_lea.sflag [#allocation6], %s1121
          %s1123 = sand.u32 %s120, 1
          %s1124 = smul.addr %s1123, 8
          %s1125 = scalar_lea.vmem [#allocation10], %s1124
          %1126 = dma.done %s1122, 128
        $region60: #{tpu_custom_call.1} parent=55 // pred_fallthru
          _
      $region56: #{tpu_custom_call.1} parent=5 // pred_fallthru
        _
    $region6: #{tpu_custom_call.1} parent=1 // loop_footer
      %s21 = sadd.s32 1, %s17
    $region7: #{tpu_custom_call.1} parent=1 // loop_footer_branch
      %16 = sbr.rel target = $region3
    $region8: #{tpu_custom_call.1} parent=1 // loop_exit
      _
    %1127 = vsyncpa [#allocation5], 1
    %s1128 = scalar_lea.sflag [#allocation5], 1
    %1129 = vsyncpa %s1128, 1
    %1130 = vsyncpa [#allocation8], 1
    %1131 = vsyncpa [#allocation6], 1
    %s1132 = scalar_lea.sflag [#allocation6], 1
    %1133 = vsyncpa %s1132, 1

</llo_original>
